<compile_context>
chip_gen: v7x
topology: tpu7x:2x2x1
jax: 0.10.0
libtpu: 0.0.40
codegen_flags: <defaults>
</compile_context>

<pallas_src>
import functools
import math

import jax
import jax.numpy as jnp
from jax import lax
from jax.experimental import pallas as pl
from jax.experimental.pallas import tpu as pltpu


_VMEM_LIMIT = 64 << 20  # explicit scoped-VMEM limit (safe middle ground across gens)


def _pick_bblk(B):
    """Largest divisor of B in {4,3,2,1}: sequences blocked per encoder grid step."""
    for cand in (4, 3, 2, 1):
        if B % cand == 0:
            return cand
    return 1


# ------------------------------------------------------------------------------
# Kernel 1: graph-guided embedding mixing + stand-in embedding epilogue
#   nodes_mask = position_idx.eq(0); token_mask = position_idx.ge(2)
#   m = nodes[:, :, None] & token[:, None, :] & attn_mask          (built in glue)
#   avg = (m @ emb) / (m.sum(-1) + 1e-10)        (normalize AFTER the exact 0/1 dot)
#   mixed = emb * (~nodes) + avg * nodes
#   h = LayerNorm(mixed + pos_emb [+ noise])     (fused epilogue, saves HBM trip)
# ------------------------------------------------------------------------------
def _embed_mix_ln_kernel(pos_col_ref, m_ref, emb_ref, add_ref, g_ref, b_ref, out_ref):
    nodes_col = (pos_col_ref[0] == 0).astype(jnp.float32)            # (S, 1)
    m = m_ref[0]                                                     # (S, S) bf16 0/1
    emb = emb_ref[0]                                                 # (S, H) f32
    cnt = jnp.sum(m.astype(jnp.float32), axis=-1, keepdims=True) + 1e-10
    avg = jnp.dot(m, emb.astype(jnp.bfloat16),
                  preferred_element_type=jnp.float32) / cnt          # exact 0/1 dot, f32 acc
    mixed = emb * (1.0 - nodes_col) + avg * nodes_col
    h = mixed + add_ref[0]                                           # + pos_emb [+ noise]
    mu = jnp.mean(h, axis=-1, keepdims=True)
    var = jnp.mean(jnp.square(h - mu), axis=-1, keepdims=True)
    out_ref[...] = (h - mu) * lax.rsqrt(var + 1e-5) * g_ref[...] + b_ref[...]


def embed_mix_ln(position_idx, attn_mask, emb, add, ln_g, ln_b):
    """Returns the FLAT (B*S, H) embedded+normalized activation."""
    B, S, H = emb.shape
    pos_col = position_idx.reshape(B, S, 1).astype(jnp.int32)
    nodes = (position_idx == 0).astype(jnp.float32)
    tokens = (position_idx >= 2).astype(jnp.float32)
    # combined node x token x attn 0/1 mask, exact in bf16 (built once in glue)
    mix_mask = (nodes[:, :, None] * tokens[:, None, :]
                * attn_mask.astype(jnp.float32)).astype(jnp.bfloat16)
    g2 = ln_g.reshape(1, H)
    b2 = ln_b.reshape(1, H)
    return pl.pallas_call(
        _embed_mix_ln_kernel,
        out_shape=jax.ShapeDtypeStruct((B * S, H), jnp.float32),
        grid=(B,),
        in_specs=[
            pl.BlockSpec((1, S, 1), lambda b: (b, 0, 0)),
            pl.BlockSpec((1, S, S), lambda b: (b, 0, 0)),
            pl.BlockSpec((1, S, H), lambda b: (b, 0, 0)),
            pl.BlockSpec((1, S, H), lambda b: (b, 0, 0)),
            pl.BlockSpec((1, H), lambda b: (0, 0)),
            pl.BlockSpec((1, H), lambda b: (0, 0)),
        ],
        out_specs=pl.BlockSpec((S, H), lambda b: (b, 0)),
        compiler_params=pltpu.CompilerParams(
            dimension_semantics=("parallel",),
            vmem_limit_bytes=_VMEM_LIMIT),
    )(pos_col, mix_mask, emb, add, g2, b2)


# ------------------------------------------------------------------------------
# Kernel 2: fused transformer encoder stack (RoBERTa-style, post-LN)
#   grid = (B/Bblk, L); the (Bblk*S, H) activation lives in the revisited output
#   block across l; per-layer bf16 weights stream once per (b-block, layer).
# ------------------------------------------------------------------------------
def _layer_norm(x, g, b, eps=1e-5):
    mu = jnp.mean(x, axis=-1, keepdims=True)
    var = jnp.mean(jnp.square(x - mu), axis=-1, keepdims=True)
    return (x - mu) * lax.rsqrt(var + eps) * g + b


def _encoder_stack_kernel(nh, hd, Bblk, S,
                          x_ref, bias_ref,
                          wq_ref, bq_ref, wk_ref, bk_ref, wv_ref, bv_ref,
                          wo_ref, bo_ref, ln1g_ref, ln1b_ref,
                          w1_ref, b1_ref, w2_ref, b2_ref, ln2g_ref, ln2b_ref,
                          out_ref, q_sc, k_sc, v_sc, ctx_sc):
    l = pl.program_id(1)

    # Layer 0 reads the embedded input; later layers read the resident activation.
    @pl.when(l == 0)
    def _():
        out_ref[...] = x_ref[...]

    x = out_ref[...]                                                 # (Bblk*S, H) f32
    x_bf = x.astype(jnp.bfloat16)

    scale = 1.0 / math.sqrt(hd)
    # QKV projections over the whole Bblk*S slab; 1/sqrt(hd) folded into Q once.
    # Q/K/V staged as bf16 VMEM scratch so per-head slices are re-read from refs
    # (short live ranges, no full-width f32 Q/K/V values held across the head loop).
    q_sc[...] = ((jnp.dot(x_bf, wq_ref[0], preferred_element_type=jnp.float32)
                  + bq_ref[0]) * scale).astype(jnp.bfloat16)
    k_sc[...] = (jnp.dot(x_bf, wk_ref[0], preferred_element_type=jnp.float32)
                 + bk_ref[0]).astype(jnp.bfloat16)
    v_sc[...] = (jnp.dot(x_bf, wv_ref[0], preferred_element_type=jnp.float32)
                 + bv_ref[0]).astype(jnp.bfloat16)

    # Attention scores/context are per-sequence, per-head (static slices keep the
    # lane indexing static; head count is small so the unroll stays modest).
    for b in range(Bblk):
        rows = slice(b * S, (b + 1) * S)
        bias_b = bias_ref[b]                                         # (S, S) f32 additive mask
        for h in range(nh):
            cols = slice(h * hd, (h + 1) * hd)
            qh = q_sc[rows, cols]                                    # (S, hd) bf16
            kh = k_sc[rows, cols]
            vh = v_sc[rows, cols]
            s = lax.dot_general(qh, kh, (((1,), (1,)), ((), ())),
                                preferred_element_type=jnp.float32) + bias_b
            s = s - jnp.max(s, axis=-1, keepdims=True)
            e = jnp.exp(s)
            # matmul the un-normalized probabilities; scale the (S, hd) context
            # instead of the (S, S) matrix (S*hd VPU muls instead of S*S).
            ctx = jnp.dot(e.astype(jnp.bfloat16), vh,
                          preferred_element_type=jnp.float32)
            ctx = ctx * pl.reciprocal(jnp.sum(e, axis=-1, keepdims=True),
                                      approx=True)
            ctx_sc[rows, cols] = ctx.astype(jnp.bfloat16)            # bf16: half store traffic

    attn_out = jnp.dot(ctx_sc[...], wo_ref[0],
                       preferred_element_type=jnp.float32) + bo_ref[0]
    x1 = _layer_norm(x + attn_out, ln1g_ref[0], ln1b_ref[0])

    ff = jax.nn.gelu(
        jnp.dot(x1.astype(jnp.bfloat16), w1_ref[0],
                preferred_element_type=jnp.float32) + b1_ref[0],
        approximate=False)                                            # exact erf GELU (HF RoBERTa)
    ff = jnp.dot(ff.astype(jnp.bfloat16), w2_ref[0],
                 preferred_element_type=jnp.float32) + b2_ref[0]
    out_ref[...] = _layer_norm(x1 + ff, ln2g_ref[0], ln2b_ref[0])


_LAYER_PARAM_ORDER = ("wq", "bq", "wk", "bk", "wv", "bv", "wo", "bo",
                      "ln1g", "ln1b", "w1", "b1", "w2", "b2", "ln2g", "ln2b")


def encoder_stack(x_flat, mask_bias, enc_params, nh, hd, B, S):
    """Run all L encoder layers in one pallas_call; grid = (B/Bblk, L)."""
    H = x_flat.shape[1]
    L = enc_params["wq"].shape[0]
    Bblk = _pick_bblk(B)
    nB = B // Bblk
    weights = [enc_params[name] for name in _LAYER_PARAM_ORDER]

    def wspec(arr):
        nd = arr.ndim
        return pl.BlockSpec((1,) + arr.shape[1:],
                            lambda bb, l, _nd=nd: (l,) + (0,) * (_nd - 1))

    return pl.pallas_call(
        functools.partial(_encoder_stack_kernel, nh, hd, Bblk, S),
        out_shape=jax.ShapeDtypeStruct((B * S, H), jnp.float32),
        grid=(nB, L),
        in_specs=[pl.BlockSpec((Bblk * S, H), lambda bb, l: (bb, 0)),
                  pl.BlockSpec((Bblk, S, S), lambda bb, l: (bb, 0, 0))]
                 + [wspec(w) for w in weights],
        out_specs=pl.BlockSpec((Bblk * S, H), lambda bb, l: (bb, 0)),
        scratch_shapes=[pltpu.VMEM((Bblk * S, H), jnp.bfloat16)] * 4,  # q, k, v, ctx
        input_output_aliases={0: 0},   # embedded input HBM buffer reused for the output
        compiler_params=pltpu.CompilerParams(
            dimension_semantics=("parallel", "arbitrary"),   # b-blocks across cores, layers carried
            vmem_limit_bytes=_VMEM_LIMIT),
    )(x_flat, mask_bias, *weights)


# ------------------------------------------------------------------------------
# Kernel 3: RobertaClassificationHead + softmax (lane-padded label dim)
#   x = features[:, 0, :]; x = tanh(dense(x)); logits = out_proj(x); prob = softmax
#   (dropout is identity in eval mode)
# ------------------------------------------------------------------------------
def _cls_head_kernel(x_ref, wd_ref, bd_ref, wp_ref, bp_ref, logits_ref, prob_ref):
    h = jnp.tanh(jnp.dot(x_ref[...], wd_ref[...],
                         preferred_element_type=jnp.float32) + bd_ref[...])
    logits = jnp.dot(h, wp_ref[...], preferred_element_type=jnp.float32) + bp_ref[...]
    logits_ref[...] = logits
    z = logits - jnp.max(logits, axis=-1, keepdims=True)
    e = jnp.exp(z)
    prob_ref[...] = e / jnp.sum(e, axis=-1, keepdims=True)


def classification_head(cls_features, params):
    B, H = cls_features.shape
    wp = params["head_wp"]
    bp = params["head_bp"]
    L = wp.shape[1]
    Lp = max(128, ((L + 127) // 128) * 128)          # lane-dense output, sliced back below
    wp_pad = jnp.zeros((H, Lp), jnp.float32).at[:, :L].set(wp)
    bp_pad = jnp.full((1, Lp), -1e9, jnp.float32).at[:, :L].set(bp)  # pads vanish in softmax
    logits_p, prob_p = pl.pallas_call(
        _cls_head_kernel,
        out_shape=(jax.ShapeDtypeStruct((B, Lp), jnp.float32),
                   jax.ShapeDtypeStruct((B, Lp), jnp.float32)),
        compiler_params=pltpu.CompilerParams(vmem_limit_bytes=_VMEM_LIMIT),
    )(cls_features, params["head_wd"], params["head_bd"], wp_pad, bp_pad)
    return logits_p[:, :L], prob_p[:, :L]


# ------------------------------------------------------------------------------
# Parameters + forward glue
# ------------------------------------------------------------------------------
def init_params(key, vocab, max_pos, H, I, num_labels, n_layers):
    keys = jax.random.split(key, 5)

    def w(k, shape, scale=0.02, dtype=jnp.float32):
        return (scale * jax.random.normal(k, shape)).astype(dtype)

    params = {
        "word_emb": w(keys[0], (vocab, H)),
        "pos_emb": w(keys[1], (max_pos, H)),
        "emb_ln_g": jnp.ones((H,), jnp.float32),
        "emb_ln_b": jnp.zeros((H,), jnp.float32),
        "head_wd": w(keys[2], (H, H)),
        "head_bd": jnp.zeros((1, H), jnp.float32),
        "head_wp": w(keys[3], (H, num_labels)),
        "head_bp": jnp.zeros((1, num_labels), jnp.float32),
    }
    L = n_layers
    lk = jax.random.split(keys[4], 6)
    # Stacked per-layer weights: bf16 MXU operands, f32 biases / LayerNorm params.
    params["enc"] = {
        "wq": w(lk[0], (L, H, H), dtype=jnp.bfloat16),
        "bq": jnp.zeros((L, 1, H), jnp.float32),
        "wk": w(lk[1], (L, H, H), dtype=jnp.bfloat16),
        "bk": jnp.zeros((L, 1, H), jnp.float32),
        "wv": w(lk[2], (L, H, H), dtype=jnp.bfloat16),
        "bv": jnp.zeros((L, 1, H), jnp.float32),
        "wo": w(lk[3], (L, H, H), dtype=jnp.bfloat16),
        "bo": jnp.zeros((L, 1, H), jnp.float32),
        "ln1g": jnp.ones((L, 1, H), jnp.float32),
        "ln1b": jnp.zeros((L, 1, H), jnp.float32),
        "w1": w(lk[4], (L, H, I), dtype=jnp.bfloat16),
        "b1": jnp.zeros((L, 1, I), jnp.float32),
        "w2": w(lk[5], (L, I, H), dtype=jnp.bfloat16),
        "b2": jnp.zeros((L, 1, H), jnp.float32),
        "ln2g": jnp.ones((L, 1, H), jnp.float32),
        "ln2b": jnp.zeros((L, 1, H), jnp.float32),
    }
    return params


def graphcodebert_noise_forward(params, nh, hd, inputs_ids, attn_mask, position_idx,
                                labels=None, noise=None):
    B, S = inputs_ids.shape
    H = params["word_emb"].shape[1]

    # word/position embedding lookups (gathers) -- glue
    emb = jnp.take(params["word_emb"], inputs_ids, axis=0)                 # (B, S, H)
    pos_e = jnp.take(params["pos_emb"], position_idx, axis=0)              # (B, S, H)
    add = pos_e if noise is None else pos_e + noise                        # additive epilogue term

    # graph-guided node aggregation + pos-emb add + embedding LayerNorm (kernel 1)
    h_flat = embed_mix_ln(position_idx, attn_mask, emb, add,
                          params["emb_ln_g"], params["emb_ln_b"])          # (B*S, H)

    # TODO(synk): the external pretrained 12-layer RoBERTa encoder is an injected
    # dependency; it is replaced here by a deterministic 2-layer stand-in with the
    # same per-layer math (fused Pallas kernel 2).
    # additive mask bias precomputed ONCE in f32, reused by every layer / batch
    mask_bias = (1.0 - attn_mask.astype(jnp.float32)) * -10000.0           # (B, S, S) f32

    seq_flat = encoder_stack(h_flat, mask_bias, params["enc"], nh, hd, B, S)
    sequence_outputs = seq_flat.reshape(B, S, H)                           # (B, S, H)

    # classification head + softmax (Pallas kernel 3)
    cls = sequence_outputs[:, 0, :]                                        # (B, H)
    logits, prob = classification_head(cls, params)

    if labels is not None:
        # TODO(synk): reference also returns outputs.attentions[0]; attention
        # probabilities are not materialized by the fused kernel.
        logp = jax.nn.log_softmax(logits, axis=-1)
        loss = -jnp.mean(jnp.take_along_axis(logp, labels[:, None], axis=1))
        return loss, prob, sequence_outputs
    return prob, logits


if __name__ == "__main__":
    B, S, H, I = 2, 16, 32, 64
    nh = 4
    hd = H // nh
    vocab, max_pos, num_labels, n_layers = 64, 64, 8, 2

    root = jax.random.PRNGKey(0)
    kp, k_ids, k_pos, k_attn, k_noise, k_lab = jax.random.split(root, 6)

    params = init_params(kp, vocab, max_pos, H, I, num_labels, n_layers)

    inputs_ids = jax.random.randint(k_ids, (B, S), 0, vocab, dtype=jnp.int32)
    # position_idx: 0 -> graph node, 1 -> special, >=2 -> code token
    position_idx = jax.random.randint(k_pos, (B, S), 0, 5, dtype=jnp.int32)
    attn_mask = (jax.random.uniform(k_attn, (B, S, S)) > 0.3).astype(jnp.float32)
    noise = 0.02 * jax.random.normal(k_noise, (B, S, H), dtype=jnp.float32)
    labels = jax.random.randint(k_lab, (B,), 0, num_labels, dtype=jnp.int32)

    # labels branch: (loss, prob, sequence_outputs)
    loss, prob, seq_out = graphcodebert_noise_forward(
        params, nh, hd, inputs_ids, attn_mask, position_idx,
        labels=labels, noise=noise)
    # no-label branch: (prob, logits)
    prob2, logits2 = graphcodebert_noise_forward(
        params, nh, hd, inputs_ids, attn_mask, position_idx)

    jax.block_until_ready((loss, prob, seq_out, prob2, logits2))
    assert prob.shape == (B, num_labels) and seq_out.shape == (B, S, H)
    assert logits2.shape == (B, num_labels)
    assert bool(jnp.all(jnp.isfinite(prob))) and bool(jnp.isfinite(loss))
    print("KERNEL_OK")
</pallas_src>

<mosaic_0001>
module attributes {stable_mosaic.version = 11 : i64} {
  func.func @_embed_mix_ln_kernel(%arg0: i32, %arg1: memref<1x16x1xi32, #tpu.memory_space<vmem>>, %arg2: memref<1x16x16xbf16, #tpu.memory_space<vmem>>, %arg3: memref<1x16x32xf32, #tpu.memory_space<vmem>>, %arg4: memref<1x16x32xf32, #tpu.memory_space<vmem>>, %arg5: memref<1x32xf32, #tpu.memory_space<vmem>>, %arg6: memref<1x32xf32, #tpu.memory_space<vmem>>, %arg7: memref<16x32xf32, #tpu.memory_space<vmem>>) attributes {dimension_semantics = [#tpu.dimension_semantics<parallel>], iteration_bounds = array<i64: 2>, scalar_prefetch = 0 : i64, scratch_operands = 0 : i64, tpu.core_type = #tpu.core_type<tc>, window_params = [{transform_indices = @transform_0, window_bounds = array<i64: 1, 16, 1>}, {transform_indices = @transform_1, window_bounds = array<i64: 1, 16, 16>}, {transform_indices = @transform_2, window_bounds = array<i64: 1, 16, 32>}, {transform_indices = @transform_3, window_bounds = array<i64: 1, 16, 32>}, {pipeline_mode = #tpu.pipeline_mode<synchronous>, transform_indices = @transform_4, window_bounds = array<i64: 1, 32>}, {pipeline_mode = #tpu.pipeline_mode<synchronous>, transform_indices = @transform_5, window_bounds = array<i64: 1, 32>}, {transform_indices = @transform_6, window_bounds = array<i64: 16, 32>}]} {
    %c0 = arith.constant 0 : index
    %c0_0 = arith.constant 0 : index
    %c0_1 = arith.constant 0 : index
    %0 = vector.load %arg1[%c0, %c0_0, %c0_1] : memref<1x16x1xi32, #tpu.memory_space<vmem>>, vector<1x16x1xi32>
    %1 = vector.shape_cast %0 : vector<1x16x1xi32> to vector<16x1xi32>
    %c0_i32 = arith.constant 0 : i32
    %2 = vector.broadcast %c0_i32 : i32 to vector<16x1xi32>
    %3 = arith.cmpi eq, %1, %2 : vector<16x1xi32>
    %4 = arith.extui %3 : vector<16x1xi1> to vector<16x1xi32>
    %5 = arith.sitofp %4 : vector<16x1xi32> to vector<16x1xf32>
    %c0_2 = arith.constant 0 : index
    %c0_3 = arith.constant 0 : index
    %c0_4 = arith.constant 0 : index
    %6 = vector.load %arg2[%c0_2, %c0_3, %c0_4] : memref<1x16x16xbf16, #tpu.memory_space<vmem>>, vector<1x16x16xbf16>
    %7 = vector.shape_cast %6 : vector<1x16x16xbf16> to vector<16x16xbf16>
    %c0_5 = arith.constant 0 : index
    %c0_6 = arith.constant 0 : index
    %c0_7 = arith.constant 0 : index
    %8 = vector.load %arg3[%c0_5, %c0_6, %c0_7] : memref<1x16x32xf32, #tpu.memory_space<vmem>>, vector<1x16x32xf32>
    %9 = vector.shape_cast %8 : vector<1x16x32xf32> to vector<16x32xf32>
    %10 = arith.extf %7 : vector<16x16xbf16> to vector<16x16xf32>
    %cst = arith.constant dense<0.000000e+00> : vector<16xf32>
    %11 = vector.multi_reduction <add>, %10, %cst [1] : vector<16x16xf32> to vector<16xf32>
    %12 = vector.shape_cast %11 : vector<16xf32> to vector<16x1xf32>
    %cst_8 = arith.constant 1.000000e-10 : f32
    %13 = vector.broadcast %cst_8 : f32 to vector<16x1xf32>
    %14 = arith.addf %12, %13 : vector<16x1xf32>
    %15 = arith.truncf %9 : vector<16x32xf32> to vector<16x32xbf16>
    %cst_9 = arith.constant dense<0.000000e+00> : vector<16x32xf32>
    %16 = tpu.matmul %7, %15, %cst_9 {dimension_numbers = #tpu.dot_dimension_numbers<[1], [0], [0], [1], [0, 0, 1, 1], [], []>} : vector<16x16xbf16>, vector<16x32xbf16>, vector<16x32xf32> -> vector<16x32xf32>
    %17 = vector.broadcast %14 : vector<16x1xf32> to vector<16x32xf32>
    %18 = arith.divf %16, %17 : vector<16x32xf32>
    %cst_10 = arith.constant 1.000000e+00 : f32
    %19 = vector.broadcast %cst_10 : f32 to vector<16x1xf32>
    %20 = arith.subf %19, %5 : vector<16x1xf32>
    %21 = vector.broadcast %20 : vector<16x1xf32> to vector<16x32xf32>
    %22 = arith.mulf %9, %21 : vector<16x32xf32>
    %23 = vector.broadcast %5 : vector<16x1xf32> to vector<16x32xf32>
    %24 = arith.mulf %18, %23 : vector<16x32xf32>
    %25 = arith.addf %22, %24 : vector<16x32xf32>
    %c0_11 = arith.constant 0 : index
    %c0_12 = arith.constant 0 : index
    %c0_13 = arith.constant 0 : index
    %26 = vector.load %arg4[%c0_11, %c0_12, %c0_13] : memref<1x16x32xf32, #tpu.memory_space<vmem>>, vector<1x16x32xf32>
    %27 = vector.shape_cast %26 : vector<1x16x32xf32> to vector<16x32xf32>
    %28 = arith.addf %25, %27 : vector<16x32xf32>
    %cst_14 = arith.constant dense<0.000000e+00> : vector<16xf32>
    %29 = vector.multi_reduction <add>, %28, %cst_14 [1] : vector<16x32xf32> to vector<16xf32>
    %30 = vector.shape_cast %29 : vector<16xf32> to vector<16x1xf32>
    %cst_15 = arith.constant 3.200000e+01 : f32
    %31 = vector.broadcast %cst_15 : f32 to vector<16x1xf32>
    %32 = arith.divf %30, %31 : vector<16x1xf32>
    %33 = vector.broadcast %32 : vector<16x1xf32> to vector<16x32xf32>
    %34 = arith.subf %28, %33 : vector<16x32xf32>
    %35 = arith.mulf %34, %34 : vector<16x32xf32>
    %cst_16 = arith.constant dense<0.000000e+00> : vector<16xf32>
    %36 = vector.multi_reduction <add>, %35, %cst_16 [1] : vector<16x32xf32> to vector<16xf32>
    %37 = vector.shape_cast %36 : vector<16xf32> to vector<16x1xf32>
    %cst_17 = arith.constant 3.200000e+01 : f32
    %38 = vector.broadcast %cst_17 : f32 to vector<16x1xf32>
    %39 = arith.divf %37, %38 : vector<16x1xf32>
    %40 = vector.broadcast %32 : vector<16x1xf32> to vector<16x32xf32>
    %41 = arith.subf %28, %40 : vector<16x32xf32>
    %cst_18 = arith.constant 9.99999974E-6 : f32
    %42 = vector.broadcast %cst_18 : f32 to vector<16x1xf32>
    %43 = arith.addf %39, %42 : vector<16x1xf32>
    %44 = math.rsqrt %43 : vector<16x1xf32>
    %45 = vector.broadcast %44 : vector<16x1xf32> to vector<16x32xf32>
    %46 = arith.mulf %41, %45 : vector<16x32xf32>
    %c0_19 = arith.constant 0 : index
    %c0_20 = arith.constant 0 : index
    %47 = vector.load %arg5[%c0_19, %c0_20] : memref<1x32xf32, #tpu.memory_space<vmem>>, vector<1x32xf32>
    %48 = vector.broadcast %47 : vector<1x32xf32> to vector<16x32xf32>
    %49 = arith.mulf %46, %48 : vector<16x32xf32>
    %c0_21 = arith.constant 0 : index
    %c0_22 = arith.constant 0 : index
    %50 = vector.load %arg6[%c0_21, %c0_22] : memref<1x32xf32, #tpu.memory_space<vmem>>, vector<1x32xf32>
    %51 = vector.broadcast %50 : vector<1x32xf32> to vector<16x32xf32>
    %52 = arith.addf %49, %51 : vector<16x32xf32>
    %c0_23 = arith.constant 0 : index
    %c0_24 = arith.constant 0 : index
    %53 = vector.load %arg7[%c0_23, %c0_24] : memref<16x32xf32, #tpu.memory_space<vmem>>, vector<16x32xf32>
    tpu.vector_store %arg7[%c0_23, %c0_24], %52 {strides = array<i32>} : memref<16x32xf32, #tpu.memory_space<vmem>>, vector<16x32xf32>,
    return
  }
  func.func @transform_0(%arg0: i32) -> (i32, i32, i32) {
    %c0_i32 = arith.constant 0 : i32
    %c0_i32_0 = arith.constant 0 : i32
    %c0_i32_1 = arith.constant 0 : i32
    return %arg0, %c0_i32, %c0_i32_0 : i32, i32, i32
  }
  func.func @transform_1(%arg0: i32) -> (i32, i32, i32) {
    %c0_i32 = arith.constant 0 : i32
    %c0_i32_0 = arith.constant 0 : i32
    %c0_i32_1 = arith.constant 0 : i32
    return %arg0, %c0_i32, %c0_i32_0 : i32, i32, i32
  }
  func.func @transform_2(%arg0: i32) -> (i32, i32, i32) {
    %c0_i32 = arith.constant 0 : i32
    %c0_i32_0 = arith.constant 0 : i32
    %c0_i32_1 = arith.constant 0 : i32
    return %arg0, %c0_i32, %c0_i32_0 : i32, i32, i32
  }
  func.func @transform_3(%arg0: i32) -> (i32, i32, i32) {
    %c0_i32 = arith.constant 0 : i32
    %c0_i32_0 = arith.constant 0 : i32
    %c0_i32_1 = arith.constant 0 : i32
    return %arg0, %c0_i32, %c0_i32_0 : i32, i32, i32
  }
  func.func @transform_4(%arg0: i32) -> (i32, i32) {
    %c0_i32 = arith.constant 0 : i32
    %c0_i32_0 = arith.constant 0 : i32
    %c0_i32_1 = arith.constant 0 : i32
    return %c0_i32, %c0_i32_0 : i32, i32
  }
  func.func @transform_5(%arg0: i32) -> (i32, i32) {
    %c0_i32 = arith.constant 0 : i32
    %c0_i32_0 = arith.constant 0 : i32
    %c0_i32_1 = arith.constant 0 : i32
    return %c0_i32, %c0_i32_0 : i32, i32
  }
  func.func @transform_6(%arg0: i32) -> (i32, i32) {
    %c0_i32 = arith.constant 0 : i32
    %c0_i32_0 = arith.constant 0 : i32
    return %arg0, %c0_i32 : i32, i32
  }
}

</mosaic_0001>

<llo_original>
// kernel: tpu_custom_call.1
$region0: #{tpu_custom_call.1}
  #allocation0 [shape = 'u32[]', space=smem, size = 0x4, offset = 0x4, fixed_abs, tag = 'smem constant byte address 0x4 - core index']
  #allocation1 [shape = 'u32[144,128]{1,0:T(1,128)}', space=vmem, size = 0x12000, scoped, tag = 'internal scratch']
  %s0 = inlined_call_operand.hbm [shape: s32[2,16,1], index: 0, kind: input, shape index: {}]
  %s1 = inlined_call_operand.hbm [shape: bf16[2,16,16], index: 1, kind: input, shape index: {}]
  %s2 = inlined_call_operand.hbm [shape: f32[2,16,32], index: 2, kind: input, shape index: {}]
  %s3 = inlined_call_operand.hbm [shape: f32[2,16,32], index: 3, kind: input, shape index: {}]
  %s4 = inlined_call_operand.hbm [shape: f32[1,32], index: 4, kind: input, shape index: {}]
  %s5 = inlined_call_operand.hbm [shape: f32[1,32], index: 5, kind: input, shape index: {}]
  %s6 = inlined_call_operand.hbm [shape: f32[32,32], index: 6, kind: output, shape index: {}]
  %s7 = sld [smem:[#allocation0]]
  $region81: #{tpu_custom_call.1} parent=0
    _
  %s9 = ssub.s32 1, %s7
  %s10 = scalar_select 0, %s9, %s7
  $region1: #{tpu_custom_call.1} parent=0
    #allocation2 [shape = 'u8[16384]{0}', space=vmem, size = 0x4000, scoped, tag = 'input window, operand 0']
    #allocation3 [shape = 's32[2]{0}', space=sflag, size = 0x8, scoped, tag = 'scoped memory for tpu_custom_call.1']
    #allocation4 [shape = 's32[2]{0}', space=sflag, size = 0x8, scoped, tag = 'scoped memory for tpu_custom_call.1']
    #allocation5 [shape = 'u8[8192]{0}', space=vmem, size = 0x2000, scoped, tag = 'input window, operand 1']
    #allocation6 [shape = 's32[2]{0}', space=sflag, size = 0x8, scoped, tag = 'scoped memory for tpu_custom_call.1']
    #allocation7 [shape = 'u8[16384]{0}', space=vmem, size = 0x4000, scoped, tag = 'input window, operand 2']
    #allocation8 [shape = 'u8[16384]{0}', space=vmem, size = 0x4000, scoped, tag = 'input window, operand 3']
    #allocation9 [shape = 's32[2]{0}', space=sflag, size = 0x8, scoped, tag = 'scoped memory for tpu_custom_call.1']
    #allocation10 [shape = 'u8[512]{0}', space=vmem, size = 0x400, scoped, tag = 'input window, operand 4, single buffered']
    #allocation11 [shape = 'u8[512]{0}', space=vmem, size = 0x400, scoped, tag = 'input window, operand 5, single buffered']
    #allocation12 [shape = 's32[1]{0}', space=sflag, size = 0x4, scoped, tag = 'scoped memory for tpu_custom_call.1']
    #allocation13 [shape = 'u8[16384]{0}', space=vmem, size = 0x4000, scoped, tag = 'output window, operand 0']
    %11 = vsyncpa [#allocation3], 0
    %s12 = scalar_lea.sflag [#allocation3], 1
    %13 = vsyncpa %s12, 0
    %14 = vsyncpa [#allocation6], 0
    %s15 = scalar_lea.sflag [#allocation6], 1
    %16 = vsyncpa %s15, 0
    %17 = vsyncpa [#allocation9], 0
    %s18 = scalar_lea.sflag [#allocation9], 1
    %19 = vsyncpa %s18, 0
    %20 = vsyncpa [#allocation12], 0
    %21 = vsyncpa [#allocation4], 0
    %s22 = scalar_lea.sflag [#allocation4], 1
    %23 = vsyncpa %s22, 0
    loop: start=0, step=1, limit=4
    $region2: #{tpu_custom_call.1} parent=1 // loop_pre_header
      _
    $region3: #{tpu_custom_call.1} parent=1 // loop_header
      %s25 = sphi 0, %s29
      %p26 = scmp.ge.s32.totalorder %s25, 4
      %s35 = sphi 0, %s37
      %s38 = sphi 0, %s35
      %s39 = sphi 0, %s38
      %s55 = sphi 0, %s39
      %s61 = sphi 0, %s63
      %s64 = sphi 0, %s61
      %s65 = sphi 0, %s64
      %s81 = sphi 0, %s65
      %s87 = sphi 0, %s89
      %s90 = sphi 0, %s87
      %s91 = sphi 0, %s90
      %s107 = sphi 0, %s91
      %s113 = sphi 0, %s115
      %s116 = sphi 0, %s113
      %s117 = sphi 0, %s116
      %s133 = sphi 0, %s117
      %s137 = sphi 0, %s137
      %s139 = sphi 0, %s137
      %s140 = sphi 0, %s139
      %s154 = sphi 0, %s140
      %s158 = sphi 0, %s158
      %s160 = sphi 0, %s158
      %s161 = sphi 0, %s160
      %s175 = sphi 0, %s161
      %s181 = sphi 0, %s183
      %s184 = sphi 0, %s181
      %s185 = sphi 0, %s184
      %s201 = sphi 0, %s185
    $region4: #{tpu_custom_call.1} parent=1 // loop_header_branch
      %28 = sbr.rel (%p26) target = $region8
    $region5: #{tpu_custom_call.1} parent=1 // loop_body
      %s30 = ssub.s32 %s25, 1
      %s31 = ssub.s32 %s25, 2
      %s32 = sadd.s32 %s25, 1
      %s33 = ssub.s32 %s25, %s32
      %p34 = scmp.eq.s32.totalorder %s33, 0
      %s36 = sadd.s32 %s35, 1
      %s37 = scalar_select %p34, %s35, %s36
      %p40 = pneg %p34
      %p41 = scmp.eq.s32.totalorder %s25, 1
      %p42 = por %p40, %p41
      %p43 = scmp.ne.s32.totalorder %s35, %s38
      %p44 = scmp.eq.s32.totalorder %s25, 0
      %p45 = por %p43, %p44
      %p46 = scmp.ne.s32.totalorder %s35, %s38
      %p47 = scmp.eq.s32.totalorder %s30, 1
      %p48 = por %p46, %p47
      %p49 = scmp.ne.s32.totalorder %s38, %s39
      %p50 = scmp.eq.s32.totalorder %s30, 0
      %p51 = por %p49, %p50
      %p52 = scmp.ne.s32.totalorder %s38, %s39
      %p53 = scmp.eq.s32.totalorder %s31, 1
      %p54 = por %p52, %p53
      %p56 = scmp.ne.s32.totalorder %s39, %s55
      %p57 = scmp.eq.s32.totalorder %s31, 0
      %p58 = por %p56, %p57
      %s59 = ssub.s32 %s25, %s32
      %p60 = scmp.eq.s32.totalorder %s59, 0
      %s62 = sadd.s32 %s61, 1
      %s63 = scalar_select %p60, %s61, %s62
      %p66 = pneg %p60
      %p67 = scmp.eq.s32.totalorder %s25, 1
      %p68 = por %p66, %p67
      %p69 = scmp.ne.s32.totalorder %s61, %s64
      %p70 = scmp.eq.s32.totalorder %s25, 0
      %p71 = por %p69, %p70
      %p72 = scmp.ne.s32.totalorder %s61, %s64
      %p73 = scmp.eq.s32.totalorder %s30, 1
      %p74 = por %p72, %p73
      %p75 = scmp.ne.s32.totalorder %s64, %s65
      %p76 = scmp.eq.s32.totalorder %s30, 0
      %p77 = por %p75, %p76
      %p78 = scmp.ne.s32.totalorder %s64, %s65
      %p79 = scmp.eq.s32.totalorder %s31, 1
      %p80 = por %p78, %p79
      %p82 = scmp.ne.s32.totalorder %s65, %s81
      %p83 = scmp.eq.s32.totalorder %s31, 0
      %p84 = por %p82, %p83
      %s85 = ssub.s32 %s25, %s32
      %p86 = scmp.eq.s32.totalorder %s85, 0
      %s88 = sadd.s32 %s87, 1
      %s89 = scalar_select %p86, %s87, %s88
      %p92 = pneg %p86
      %p93 = scmp.eq.s32.totalorder %s25, 1
      %p94 = por %p92, %p93
      %p95 = scmp.ne.s32.totalorder %s87, %s90
      %p96 = scmp.eq.s32.totalorder %s25, 0
      %p97 = por %p95, %p96
      %p98 = scmp.ne.s32.totalorder %s87, %s90
      %p99 = scmp.eq.s32.totalorder %s30, 1
      %p100 = por %p98, %p99
      %p101 = scmp.ne.s32.totalorder %s90, %s91
      %p102 = scmp.eq.s32.totalorder %s30, 0
      %p103 = por %p101, %p102
      %p104 = scmp.ne.s32.totalorder %s90, %s91
      %p105 = scmp.eq.s32.totalorder %s31, 1
      %p106 = por %p104, %p105
      %p108 = scmp.ne.s32.totalorder %s91, %s107
      %p109 = scmp.eq.s32.totalorder %s31, 0
      %p110 = por %p108, %p109
      %s111 = ssub.s32 %s25, %s32
      %p112 = scmp.eq.s32.totalorder %s111, 0
      %s114 = sadd.s32 %s113, 1
      %s115 = scalar_select %p112, %s113, %s114
      %p118 = pneg %p112
      %p119 = scmp.eq.s32.totalorder %s25, 1
      %p120 = por %p118, %p119
      %p121 = scmp.ne.s32.totalorder %s113, %s116
      %p122 = scmp.eq.s32.totalorder %s25, 0
      %p123 = por %p121, %p122
      %p124 = scmp.ne.s32.totalorder %s113, %s116
      %p125 = scmp.eq.s32.totalorder %s30, 1
      %p126 = por %p124, %p125
      %p127 = scmp.ne.s32.totalorder %s116, %s117
      %p128 = scmp.eq.s32.totalorder %s30, 0
      %p129 = por %p127, %p128
      %p130 = scmp.ne.s32.totalorder %s116, %s117
      %p131 = scmp.eq.s32.totalorder %s31, 1
      %p132 = por %p130, %p131
      %p134 = scmp.ne.s32.totalorder %s117, %s133
      %p135 = scmp.eq.s32.totalorder %s31, 0
      %p136 = por %p134, %p135
      %s138 = sadd.s32 %s137, 1
      %p141 = scmp.eq.s32.totalorder %s25, 1
      %p142 = scmp.ne.s32.totalorder %s137, %s139
      %p143 = scmp.eq.s32.totalorder %s25, 0
      %p144 = por %p142, %p143
      %p145 = scmp.ne.s32.totalorder %s137, %s139
      %p146 = scmp.eq.s32.totalorder %s30, 1
      %p147 = por %p145, %p146
      %p148 = scmp.ne.s32.totalorder %s139, %s140
      %p149 = scmp.eq.s32.totalorder %s30, 0
      %p150 = por %p148, %p149
      %p151 = scmp.ne.s32.totalorder %s139, %s140
      %p152 = scmp.eq.s32.totalorder %s31, 1
      %p153 = por %p151, %p152
      %p155 = scmp.ne.s32.totalorder %s140, %s154
      %p156 = scmp.eq.s32.totalorder %s31, 0
      %p157 = por %p155, %p156
      %s159 = sadd.s32 %s158, 1
      %p162 = scmp.eq.s32.totalorder %s25, 1
      %p163 = scmp.ne.s32.totalorder %s158, %s160
      %p164 = scmp.eq.s32.totalorder %s25, 0
      %p165 = por %p163, %p164
      %p166 = scmp.ne.s32.totalorder %s158, %s160
      %p167 = scmp.eq.s32.totalorder %s30, 1
      %p168 = por %p166, %p167
      %p169 = scmp.ne.s32.totalorder %s160, %s161
      %p170 = scmp.eq.s32.totalorder %s30, 0
      %p171 = por %p169, %p170
      %p172 = scmp.ne.s32.totalorder %s160, %s161
      %p173 = scmp.eq.s32.totalorder %s31, 1
      %p174 = por %p172, %p173
      %p176 = scmp.ne.s32.totalorder %s161, %s175
      %p177 = scmp.eq.s32.totalorder %s31, 0
      %p178 = por %p176, %p177
      %s179 = ssub.s32 %s25, %s32
      %p180 = scmp.eq.s32.totalorder %s179, 0
      %s182 = sadd.s32 %s181, 1
      %s183 = scalar_select %p180, %s181, %s182
      %p186 = pneg %p180
      %p187 = scmp.eq.s32.totalorder %s25, 1
      %p188 = por %p186, %p187
      %p189 = scmp.ne.s32.totalorder %s181, %s184
      %p190 = scmp.eq.s32.totalorder %s25, 0
      %p191 = por %p189, %p190
      %p192 = scmp.ne.s32.totalorder %s181, %s184
      %p193 = scmp.eq.s32.totalorder %s30, 1
      %p194 = por %p192, %p193
      %p195 = scmp.ne.s32.totalorder %s184, %s185
      %p196 = scmp.eq.s32.totalorder %s30, 0
      %p197 = por %p195, %p196
      %p198 = scmp.ne.s32.totalorder %s184, %s185
      %p199 = scmp.eq.s32.totalorder %s31, 1
      %p200 = por %p198, %p199
      %p202 = scmp.ne.s32.totalorder %s185, %s201
      %p203 = scmp.eq.s32.totalorder %s31, 0
      %p204 = por %p202, %p203
      %p205 = scmp.le.s32.totalorder 1, %s25
      %p206 = scmp.lt.s32.totalorder %s25, 3
      %p207 = pnand %p205, %p206
      %p208 = pneg %p207
      // Predicated region
      $region9: #{tpu_custom_call.1} parent=5 // pred_check
        _
      $region10: #{tpu_custom_call.1} parent=5 // pred_check_branch
        %210 = sbr.rel (%p207) target = $region12
      $region11: #{tpu_custom_call.1} parent=5 // pred_region
        %s211 = ssub.s32 %s25, 1
        // Predicated region
        $region13: #{tpu_custom_call.1} parent=11 // pred_check
          %p212 = pneg %p150
        $region14: #{tpu_custom_call.1} parent=11 // pred_check_branch
          %214 = sbr.rel (%p212) target = $region16
        $region15: #{tpu_custom_call.1} parent=11 // pred_region
          %s216 = ssub.s32 16, 16
          %217 = vsyncadd [#allocation9], %s216
          %s219 = sshll.u32 [#allocation10], 4
          %s220 = int_to_ptr.vmem [resolvable:$true] %s219
          %222 = dma.hbm_to_vmem [thread:$0]  %s4, 16, %s220, [#allocation9]
        $region16: #{tpu_custom_call.1} parent=11 // pred_fallthru
          _
        // Predicated region
        $region17: #{tpu_custom_call.1} parent=11 // pred_check
          %p223 = pneg %p171
        $region18: #{tpu_custom_call.1} parent=11 // pred_check_branch
          %225 = sbr.rel (%p223) target = $region20
        $region19: #{tpu_custom_call.1} parent=11 // pred_region
          %s227 = ssub.s32 16, 16
          %228 = vsyncadd [#allocation12], %s227
          %s230 = sshll.u32 [#allocation11], 4
          %s231 = int_to_ptr.vmem [resolvable:$true] %s230
          %233 = dma.hbm_to_vmem [thread:$0]  %s5, 16, %s231, [#allocation12]
        $region20: #{tpu_custom_call.1} parent=11 // pred_fallthru
          _
      $region12: #{tpu_custom_call.1} parent=5 // pred_fallthru
        _
      %p234 = scmp.lt.s32.totalorder %s25, 2
      // Predicated region
      $region21: #{tpu_custom_call.1} parent=5 // pred_check
        %p235 = pneg %p234
      $region22: #{tpu_custom_call.1} parent=5 // pred_check_branch
        %237 = sbr.rel (%p235) target = $region24
      $region23: #{tpu_custom_call.1} parent=5 // pred_region
        // Predicated region
        $region25: #{tpu_custom_call.1} parent=23 // pred_check
          %p238 = pneg %p45
        $region26: #{tpu_custom_call.1} parent=23 // pred_check_branch
          %240 = sbr.rel (%p238) target = $region28
        $region27: #{tpu_custom_call.1} parent=23 // pred_region
          %s241 = sand.u32 %s35, 1
          %s242 = scalar_lea.sflag [#allocation3], %s241
          %s243 = sand.u32 %s35, 1
          %s244 = smul.addr %s243, 16
          %s245 = scalar_lea.vmem [#allocation2], %s244
          %s247 = ssub.s32 256, 256
          %248 = vsyncadd %s242, %s247
          %s249 = smul.addr %s25, 2
          %s250 = smul.addr %s249, 128
          %s251 = scalar_lea.hbm %s0, %s250
          %s252 = sshll.u32 %s245, 4
          %s253 = int_to_ptr.vmem [resolvable:$true] %s252
          %258 = dma.hbm_to_vmem [thread:$0]  %s251, 256, %s253, %s242, 128, 128, 8
        $region28: #{tpu_custom_call.1} parent=23 // pred_fallthru
          _
        // Predicated region
        $region29: #{tpu_custom_call.1} parent=23 // pred_check
          %p259 = pneg %p71
        $region30: #{tpu_custom_call.1} parent=23 // pred_check_branch
          %261 = sbr.rel (%p259) target = $region32
        $region31: #{tpu_custom_call.1} parent=23 // pred_region
          %s262 = sand.u32 %s25, 1
          %s263 = scalar_lea.sflag [#allocation6], %s262
          %s264 = sand.u32 %s61, 1
          %s265 = smul.addr %s264, 8
          %s266 = scalar_lea.vmem [#allocation5], %s265
          %s268 = ssub.s32 128, 128
          %269 = vsyncadd %s263, %s268
          %s270 = smul.addr %s25, 2
          %s271 = smul.addr %s270, 64
          %s272 = scalar_lea.hbm %s1, %s271
          %s273 = sshll.u32 %s266, 4
          %s274 = int_to_ptr.vmem [resolvable:$true] %s273
          %279 = dma.hbm_to_vmem [thread:$0]  %s272, 128, %s274, %s263, 64, 64, 4
        $region32: #{tpu_custom_call.1} parent=23 // pred_fallthru
          _
        // Predicated region
        $region33: #{tpu_custom_call.1} parent=23 // pred_check
          %p280 = pneg %p97
        $region34: #{tpu_custom_call.1} parent=23 // pred_check_branch
          %282 = sbr.rel (%p280) target = $region36
        $region35: #{tpu_custom_call.1} parent=23 // pred_region
          %s283 = sand.u32 %s25, 1
          %s284 = scalar_lea.sflag [#allocation6], %s283
          %s285 = sand.u32 %s87, 1
          %s286 = smul.addr %s285, 16
          %s287 = scalar_lea.vmem [#allocation7], %s286
          %s289 = ssub.s32 256, 256
          %290 = vsyncadd %s284, %s289
          %s291 = smul.addr %s25, 2
          %s292 = smul.addr %s291, 128
          %s293 = scalar_lea.hbm %s2, %s292
          %s294 = sshll.u32 %s287, 4
          %s295 = int_to_ptr.vmem [resolvable:$true] %s294
          %300 = dma.hbm_to_vmem [thread:$0]  %s293, 256, %s295, %s284, 128, 128, 8
        $region36: #{tpu_custom_call.1} parent=23 // pred_fallthru
          _
        // Predicated region
        $region37: #{tpu_custom_call.1} parent=23 // pred_check
          %p301 = pneg %p123
        $region38: #{tpu_custom_call.1} parent=23 // pred_check_branch
          %303 = sbr.rel (%p301) target = $region40
        $region39: #{tpu_custom_call.1} parent=23 // pred_region
          %s304 = sand.u32 %s25, 1
          %s305 = scalar_lea.sflag [#allocation9], %s304
          %s306 = sand.u32 %s113, 1
          %s307 = smul.addr %s306, 16
          %s308 = scalar_lea.vmem [#allocation8], %s307
          %s310 = ssub.s32 256, 256
          %311 = vsyncadd %s305, %s310
          %s312 = smul.addr %s25, 2
          %s313 = smul.addr %s312, 128
          %s314 = scalar_lea.hbm %s3, %s313
          %s315 = sshll.u32 %s308, 4
          %s316 = int_to_ptr.vmem [resolvable:$true] %s315
          %321 = dma.hbm_to_vmem [thread:$0]  %s314, 256, %s316, %s305, 128, 128, 8
        $region40: #{tpu_custom_call.1} parent=23 // pred_fallthru
          _
      $region24: #{tpu_custom_call.1} parent=5 // pred_fallthru
        _
      %p322 = scmp.le.s32.totalorder 1, %s25
      %p323 = scmp.lt.s32.totalorder %s25, 3
      %p324 = pnand %p322, %p323
      %p325 = pneg %p324
      // Predicated region
      $region41: #{tpu_custom_call.1} parent=5 // pred_check
        _
      $region42: #{tpu_custom_call.1} parent=5 // pred_check_branch
        %327 = sbr.rel (%p324) target = $region44
      $region43: #{tpu_custom_call.1} parent=5 // pred_region
        %s328 = ssub.s32 %s25, 1
        %s329 = sand.u32 %s38, 1
        %s330 = scalar_lea.sflag [#allocation3], %s329
        %s331 = sand.u32 %s38, 1
        %s332 = smul.addr %s331, 16
        %s333 = scalar_lea.vmem [#allocation2], %s332
        // Predicated region
        $region45: #{tpu_custom_call.1} parent=43 // pred_check
          %p334 = pneg %p51
        $region46: #{tpu_custom_call.1} parent=43 // pred_check_branch
          %336 = sbr.rel (%p334) target = $region48
        $region47: #{tpu_custom_call.1} parent=43 // pred_region
          %337 = dma.done %s330, 256
        $region48: #{tpu_custom_call.1} parent=43 // pred_fallthru
          _
        %s338 = sand.u32 %s30, 1
        %s339 = scalar_lea.sflag [#allocation6], %s338
        %s340 = sand.u32 %s64, 1
        %s341 = smul.addr %s340, 8
        %s342 = scalar_lea.vmem [#allocation5], %s341
        // Predicated region
        $region49: #{tpu_custom_call.1} parent=43 // pred_check
          %p343 = pneg %p77
        $region50: #{tpu_custom_call.1} parent=43 // pred_check_branch
          %345 = sbr.rel (%p343) target = $region52
        $region51: #{tpu_custom_call.1} parent=43 // pred_region
          %346 = dma.done %s339, 128
        $region52: #{tpu_custom_call.1} parent=43 // pred_fallthru
          _
        %s347 = sand.u32 %s30, 1
        %s348 = scalar_lea.sflag [#allocation6], %s347
        %s349 = sand.u32 %s90, 1
        %s350 = smul.addr %s349, 16
        %s351 = scalar_lea.vmem [#allocation7], %s350
        // Predicated region
        $region53: #{tpu_custom_call.1} parent=43 // pred_check
          %p352 = pneg %p103
        $region54: #{tpu_custom_call.1} parent=43 // pred_check_branch
          %354 = sbr.rel (%p352) target = $region56
        $region55: #{tpu_custom_call.1} parent=43 // pred_region
          %355 = dma.done %s348, 256
        $region56: #{tpu_custom_call.1} parent=43 // pred_fallthru
          _
        %s356 = sand.u32 %s30, 1
        %s357 = scalar_lea.sflag [#allocation9], %s356
        %s358 = sand.u32 %s116, 1
        %s359 = smul.addr %s358, 16
        %s360 = scalar_lea.vmem [#allocation8], %s359
        // Predicated region
        $region57: #{tpu_custom_call.1} parent=43 // pred_check
          %p361 = pneg %p129
        $region58: #{tpu_custom_call.1} parent=43 // pred_check_branch
          %363 = sbr.rel (%p361) target = $region60
        $region59: #{tpu_custom_call.1} parent=43 // pred_region
          %364 = dma.done %s357, 256
        $region60: #{tpu_custom_call.1} parent=43 // pred_fallthru
          _
        // Predicated region
        $region61: #{tpu_custom_call.1} parent=43 // pred_check
          %p365 = pneg %p150
        $region62: #{tpu_custom_call.1} parent=43 // pred_check_branch
          %367 = sbr.rel (%p365) target = $region64
        $region63: #{tpu_custom_call.1} parent=43 // pred_region
          %368 = dma.done [#allocation9], 16
        $region64: #{tpu_custom_call.1} parent=43 // pred_fallthru
          _
        // Predicated region
        $region65: #{tpu_custom_call.1} parent=43 // pred_check
          %p369 = pneg %p171
        $region66: #{tpu_custom_call.1} parent=43 // pred_check_branch
          %371 = sbr.rel (%p369) target = $region68
        $region67: #{tpu_custom_call.1} parent=43 // pred_region
          %372 = dma.done [#allocation12], 16
        $region68: #{tpu_custom_call.1} parent=43 // pred_fallthru
          _
        %s373 = sand.u32 %s38, 1
        %s374 = scalar_lea.sflag [#allocation3], %s373
        %s375 = sand.u32 %s38, 1
        %s376 = smul.addr %s375, 16
        %s377 = scalar_lea.vmem [#allocation2], %s376
        %p378 = pneg %p51
        %p379 = pneg %p48
        %s380 = sand.u32 %s30, 1
        %s381 = scalar_lea.sflag [#allocation6], %s380
        %s382 = sand.u32 %s64, 1
        %s383 = smul.addr %s382, 8
        %s384 = scalar_lea.vmem [#allocation5], %s383
        %p385 = pneg %p77
        %p386 = pneg %p74
        %s387 = sand.u32 %s30, 1
        %s388 = scalar_lea.sflag [#allocation6], %s387
        %s389 = sand.u32 %s90, 1
        %s390 = smul.addr %s389, 16
        %s391 = scalar_lea.vmem [#allocation7], %s390
        %p392 = pneg %p103
        %p393 = pneg %p100
        %s394 = sand.u32 %s30, 1
        %s395 = scalar_lea.sflag [#allocation9], %s394
        %s396 = sand.u32 %s116, 1
        %s397 = smul.addr %s396, 16
        %s398 = scalar_lea.vmem [#allocation8], %s397
        %p399 = pneg %p129
        %p400 = pneg %p126
        %p401 = pneg %p150
        %p402 = pneg %p147
        %p403 = pneg %p171
        %p404 = pneg %p168
        %p405 = pneg %p197
        %p406 = pneg %p194
        %s407 = sand.u32 %s184, 1
        %s408 = scalar_lea.sflag [#allocation4], %s407
        %s409 = sand.u32 %s184, 1
        %s410 = smul.addr %s409, 16
        %s411 = scalar_lea.vmem [#allocation13], %s410
        %s412 = smul.u32 2, %s30
        %v414 = vld [vmem:[%s333] sm:$0xff]
        %v415 = vld [vmem:[%s333 + $0x8] sm:$0xff]
        %vm416 = vcmp.eq.s32.totalorder %v414, 0
        %vm417 = vcmp.eq.s32.totalorder %v415, 0
        %v418 = vsel %vm416, 1, 0
        %v419 = vsel %vm417, 1, 0
        %v420 = vcvt.s32.f32 %v418
        %v421 = vcvt.s32.f32 %v419
        %v422 = vld [vmem:[%s342] sm:$0xf]
        %v423 = vld [vmem:[%s342 + $0x4] sm:$0xf]
        %v424 = vld [vmem:[%s351] sm:$0xff]
        %v425 = vld [vmem:[%s351 + $0x8] sm:$0xff]
        %v426 = vunpack.c.l.bf16 %v422
        %v427 = vunpack.c.l.bf16 %v423
        %vm428 = vcmask 130048
        %v429 = vsel %vm428, %v426, 0.0
        %430 = vadd.xlane.f32.xlu0 %v429
        %v431 = vpop.xlane.xlu0 %430
        %v432 = vsel %vm428, %v427, 0.0
        %433 = vadd.xlane.f32.xlu0 %v432
        %v434 = vpop.xlane.xlu0 %433
        %v435 = vadd.f32 %v431, 1e-10
        %v436 = vadd.f32 %v434, 1e-10
        %v437 = vpack.c.bf16 %v425, %v424
        %v440 = vunpack.c.l.b16 %v422
        %v441 = vunpack.c.l.b16 %v423
        %v442 = vpack.c.b16 %v441, %v440
        %v444 = vsel %vm428, %v442, 0
        %446 = vmatprep.subr.bf16.mxu0 0
        %447 = vmatpush1.bf16.msra.mxu0 %v437
        %448 = vmatprep.subr.bf16.mxu0 0
        %449 = vmatpush1.bf16.msra.mxu0 0
        %450 = vmatprep.subr.bf16.mxu0 0
        %451 = vmatpush1.bf16.msra.mxu0 0
        %452 = vmatprep.subr.bf16.mxu0 0
        %453 = vmatpush1.bf16.msra.mxu0 0
        %454 = vmatprep.subr.bf16.mxu0 0
        %455 = vmatpush1.bf16.msra.mxu0 0
        %456 = vmatprep.subr.bf16.mxu0 0
        %457 = vmatpush1.bf16.msra.mxu0 0
        %458 = vmatprep.subr.bf16.mxu0 0
        %459 = vmatpush1.bf16.msra.mxu0 0
        %460 = vmatprep.subr.bf16.mxu0 0
        %461 = vmatpush1.bf16.msra.mxu0 0
        %462 = vmatprep.subr.bf16.mxu0 0
        %463 = vmatpush1.bf16.msra.mxu0 0
        %464 = vmatprep.subr.bf16.mxu0 0
        %465 = vmatpush1.bf16.msra.mxu0 0
        %466 = vmatprep.subr.bf16.mxu0 0
        %467 = vmatpush1.bf16.msra.mxu0 0
        %468 = vmatprep.subr.bf16.mxu0 0
        %469 = vmatpush1.bf16.msra.mxu0 0
        %470 = vmatprep.subr.bf16.mxu0 0
        %471 = vmatpush1.bf16.msra.mxu0 0
        %472 = vmatprep.subr.bf16.mxu0 0
        %473 = vmatpush1.bf16.msra.mxu0 0
        %474 = vmatprep.subr.bf16.mxu0 0
        %475 = vmatpush1.bf16.msra.mxu0 0
        %476 = vmatprep.subr.bf16.mxu0 0
        %477 = vmatpush1.bf16.msra.mxu0 0
        %478 = vmatprep.mubr.bf16.mxu0 0
        %479 = vmatmul.mubr.bf16.gmra.mrb[0].mxu0 %v444
        %v480 = vpop.f32.mrb[0].mxu0
        %v481 = vadd.f32 0.0, %v480
        %v482 = vpop.f32.mrb[0].mxu0
        %v483 = vpop.f32.mrb[0].mxu0
        %v484 = vadd.f32 0.0, %v483
        %v485 = vpop.f32.mrb[0].mxu0
        %486 = vdwg.mxu0
        %v487 = vrcp.pop %v435
        %v488 = vmul.f32 %v481, %v487
        %v489 = vrcp.pop %v436
        %v490 = vmul.f32 %v484, %v489
        %v491 = vsub.f32 1.0, %v420
        %v492 = vsub.f32 1.0, %v421
        %494 = vset.pattern.permute.xlu0 0
        %495 = vperm.xlu0 %494, %v491
        %v496 = vpop.permute.xlu0 %495
        %499 = vset.pattern.permute.xlu0 0
        %500 = vperm.xlu0 %499, %v492
        %v501 = vpop.permute.xlu0 %500
        %v503 = vmul.f32 %v424, %v496
        %v504 = vmul.f32 %v425, %v501
        %506 = vset.pattern.permute.xlu0 0
        %507 = vperm.xlu0 %506, %v420
        %v508 = vpop.permute.xlu0 %507
        %511 = vset.pattern.permute.xlu0 0
        %512 = vperm.xlu0 %511, %v421
        %v513 = vpop.permute.xlu0 %512
        %v515 = vmul.f32 %v488, %v508
        %v516 = vmul.f32 %v490, %v513
        %v517 = vadd.f32 %v503, %v515
        %v518 = vadd.f32 %v504, %v516
        %v519 = vld [vmem:[%s360] sm:$0xff]
        %v520 = vld [vmem:[%s360 + $0x8] sm:$0xff]
        %v521 = vadd.f32 %v517, %v519
        %v522 = vadd.f32 %v518, %v520
        %vm523 = vcmask 261120
        %v524 = vsel %vm523, %v521, 0.0
        %525 = vadd.xlane.f32.xlu0 %v524
        %v526 = vpop.xlane.xlu0 %525
        %v527 = vsel %vm523, %v522, 0.0
        %528 = vadd.xlane.f32.xlu0 %v527
        %v529 = vpop.xlane.xlu0 %528
        %v530 = vrcp.pop 32.0
        %v531 = vmul.f32 %v526, %v530
        %v532 = vmul.f32 %v529, %v530
        %v533 = vsub.f32 %v521, %v531
        %v534 = vsub.f32 %v522, %v532
        %v535 = vmul.f32 %v533, %v533
        %v536 = vmul.f32 %v534, %v534
        %v537 = vsel %vm523, %v535, 0.0
        %538 = vadd.xlane.f32.xlu0 %v537
        %v539 = vpop.xlane.xlu0 %538
        %v540 = vsel %vm523, %v536, 0.0
        %541 = vadd.xlane.f32.xlu0 %v540
        %v542 = vpop.xlane.xlu0 %541
        %v543 = vmul.f32 %v539, %v530
        %v544 = vmul.f32 %v542, %v530
        %v545 = vadd.f32 %v543, 1e-05
        %v546 = vadd.f32 %v544, 1e-05
        %v547 = vrsqrt.pop %v545
        %v548 = vrsqrt.pop %v546
        %v549 = vmul.f32 %v533, %v547
        %v550 = vmul.f32 %v534, %v548
        %v551 = vld [vmem:[#allocation10] sm:$0x1]
        %v553 = vlaneseq
        %v554 = vshrl.u32 %v553, 7
        %v555 = vsub.s32 0, %v554
        %v556 = vrot.slane %v551, %v555
        %v558 = vmul.f32 %v549, %v556
        %v559 = vmul.f32 %v550, %v556
        %v560 = vld [vmem:[#allocation11] sm:$0x1]
        %v562 = vlaneseq
        %v563 = vshrl.u32 %v562, 7
        %v564 = vsub.s32 0, %v563
        %v565 = vrot.slane %v560, %v564
        %v567 = vadd.f32 %v558, %v565
        %v568 = vadd.f32 %v559, %v565
        %569 = vst.msk [vmem:[%s411] sm:$0xff] %vm523, %v567
        %570 = vst.msk [vmem:[%s411 + $0x8] sm:$0xff] %vm523, %v568
        %s571 = sand.u32 %s184, 1
        %s572 = scalar_lea.sflag [#allocation4], %s571
        %s573 = sand.u32 %s184, 1
        %s574 = smul.addr %s573, 16
        %s575 = scalar_lea.vmem [#allocation13], %s574
        // Predicated region
        $region69: #{tpu_custom_call.1} parent=43 // pred_check
          %p576 = pneg %p194
        $region70: #{tpu_custom_call.1} parent=43 // pred_check_branch
          %578 = sbr.rel (%p576) target = $region72
        $region71: #{tpu_custom_call.1} parent=43 // pred_region
          %s579 = smul.u32 2, %s30
          %s581 = ssub.s32 256, 256
          %582 = vsyncadd %s572, %s581
          %s583 = smul.addr %s579, 128
          %s584 = scalar_lea.hbm %s6, %s583
          %s585 = sshll.u32 %s575, 4
          %s586 = int_to_ptr.vmem [resolvable:$true] %s585
          %591 = dma.vmem_to_hbm [thread:$0]  %s586, 256, %s584, %s572, 128, 128, 8
        $region72: #{tpu_custom_call.1} parent=43 // pred_fallthru
          _
      $region44: #{tpu_custom_call.1} parent=5 // pred_fallthru
        _
      %p592 = scmp.le.s32.totalorder 2, %s25
      // Predicated region
      $region73: #{tpu_custom_call.1} parent=5 // pred_check
        %p593 = pneg %p592
      $region74: #{tpu_custom_call.1} parent=5 // pred_check_branch
        %595 = sbr.rel (%p593) target = $region76
      $region75: #{tpu_custom_call.1} parent=5 // pred_region
        %s596 = ssub.s32 %s25, 2
        // Predicated region
        $region77: #{tpu_custom_call.1} parent=75 // pred_check
          %p597 = pneg %p200
        $region78: #{tpu_custom_call.1} parent=75 // pred_check_branch
          %599 = sbr.rel (%p597) target = $region80
        $region79: #{tpu_custom_call.1} parent=75 // pred_region
          %s600 = sand.u32 %s185, 1
          %s601 = scalar_lea.sflag [#allocation4], %s600
          %s602 = sand.u32 %s185, 1
          %s603 = smul.addr %s602, 16
          %s604 = scalar_lea.vmem [#allocation13], %s603
          %605 = dma.done %s601, 256
        $region80: #{tpu_custom_call.1} parent=75 // pred_fallthru
          _
      $region76: #{tpu_custom_call.1} parent=5 // pred_fallthru
        _
    $region6: #{tpu_custom_call.1} parent=1 // loop_footer
      %s29 = sadd.s32 1, %s25
    $region7: #{tpu_custom_call.1} parent=1 // loop_footer_branch
      %24 = sbr.rel target = $region3
    $region8: #{tpu_custom_call.1} parent=1 // loop_exit
      _
    %606 = vsyncpa [#allocation3], 1
    %s607 = scalar_lea.sflag [#allocation3], 1
    %608 = vsyncpa %s607, 1
    %609 = vsyncpa [#allocation6], 1
    %s610 = scalar_lea.sflag [#allocation6], 1
    %611 = vsyncpa %s610, 1
    %612 = vsyncpa [#allocation9], 1
    %s613 = scalar_lea.sflag [#allocation9], 1
    %614 = vsyncpa %s613, 1
    %615 = vsyncpa [#allocation12], 1
    %616 = vsyncpa [#allocation4], 1
    %s617 = scalar_lea.sflag [#allocation4], 1
    %618 = vsyncpa %s617, 1

</llo_original>
